<compile_context>
chip_gen: v7x
topology: tpu7x:2x2x1
jax: 0.10.0
libtpu: 0.0.40
codegen_flags: <defaults>
</compile_context>

<pallas_src>
import functools

import jax
import jax.numpy as jnp
from jax.experimental import pallas as pl
from jax.experimental.pallas import tpu as pltpu


def _round_up(v, m):
    return (v + m - 1) // m * m


# ---------------------------------------------------------------------------
# Kernel A (per M tile): conv as one im2col MXU matmul (bias-free), partial BN
# statistics accumulated across the grid, and 3x3/s2 maxpool from tap slices.
# ---------------------------------------------------------------------------
def conv_pool_stats_kernel(patches_ref, wmat_ref,
                           conv_ref, pool_ref, sum_ref, sumsq_ref):
    i = pl.program_id(0)

    # conv branch: one (Copad, 9*Cpad) @ (9*Cpad, TM) matmul; conv bias omitted
    # because training-mode BN mean subtraction cancels it exactly.
    acc = jnp.dot(wmat_ref[...], patches_ref[...],
                  preferred_element_type=jnp.float32)            # (Copad, TM)
    conv_ref[...] = acc

    # partial BN stats, accumulated across the ("arbitrary") M grid axis.
    @pl.when(i == 0)
    def _():
        sum_ref[...] = jnp.zeros_like(sum_ref)
        sumsq_ref[...] = jnp.zeros_like(sumsq_ref)

    sum_ref[...] += jnp.sum(acc, axis=1, keepdims=True)          # (Copad, 1)
    sumsq_ref[...] += jnp.sum(acc * acc, axis=1, keepdims=True)  # (Copad, 1)

    # maxpool branch: elementwise max over the 9 tap row-slices of the SAME
    # patches slab (rows t*Cpad:(t+1)*Cpad are sublane-aligned, Cpad % 8 == 0).
    cpad = pool_ref.shape[0]
    mx = patches_ref[0:cpad, :]
    for t in range(1, 9):
        mx = jnp.maximum(mx, patches_ref[t * cpad:(t + 1) * cpad, :])
    pool_ref[...] = mx


# ---------------------------------------------------------------------------
# Kernel B (per M tile): finalize BN stats -> per-channel scale/shift,
# apply affine + ReLU.  Fully independent tiles -> "parallel" (megacore).
# ---------------------------------------------------------------------------
def bn_relu_kernel(conv_ref, sum_ref, sumsq_ref, gamma_ref, beta_ref, y1_ref,
                   *, inv_m, eps):
    mean = sum_ref[...] * inv_m                                  # (Copad, 1)
    var = sumsq_ref[...] * inv_m - mean * mean                   # biased var
    scale = gamma_ref[...] * jax.lax.rsqrt(var + eps)
    shift = beta_ref[...] - mean * scale
    y1_ref[...] = jnp.maximum(conv_ref[...] * scale + shift, 0.0)


def downsample_forward(x_nchw, params):
    w, g, be = params["w"], params["g"], params["be"]
    # params["b"] (conv bias) is intentionally unused: it is exactly cancelled
    # by the training-mode BatchNorm mean subtraction.
    cout, cin = int(w.shape[0]), int(w.shape[1])
    cpad = _round_up(cin, 8)
    copad = _round_up(cout, 8)

    x = jnp.transpose(x_nchw, (0, 2, 3, 1)).astype(jnp.float32)  # NCHW -> NHWC
    n, h, wdt, _ = x.shape
    ho = (h - 3) // 2 + 1
    wo = (wdt - 3) // 2 + 1
    m = n * ho * wo

    tm = min(512, _round_up(m, 128))         # lane-dense tile, multiple of 128
    m_pad = _round_up(m, tm)
    num_tiles = m_pad // tm

    # ---- wrapper-side layout plumbing only (pad / gather / reshape) ---------
    if cpad != cin:
        x = jnp.pad(x, ((0, 0), (0, 0), (0, 0), (0, cpad - cin)))
    taps = [x[:, di:di + 2 * (ho - 1) + 1:2, dj:dj + 2 * (wo - 1) + 1:2, :]
            for di in range(3) for dj in range(3)]               # 9 x (N,Ho,Wo,Cpad)
    patches = jnp.transpose(jnp.stack(taps, axis=0),
                            (0, 4, 1, 2, 3)).reshape(9 * cpad, m)  # tap-major, cin-minor
    patches = jnp.pad(patches, ((0, 0), (0, m_pad - m)))         # zero pad lanes

    # conv weight OIHW -> (Copad, 9*Cpad); column order (tap, cin) matches rows.
    w_p = jnp.zeros((copad, cpad, 3, 3), jnp.float32)
    w_p = w_p.at[:cout, :cin].set(w.astype(jnp.float32))
    wmat = jnp.transpose(w_p, (0, 2, 3, 1)).reshape(copad, 9 * cpad)

    gamma = jnp.zeros((copad, 1), jnp.float32).at[:cout, 0].set(g.astype(jnp.float32))
    beta = jnp.zeros((copad, 1), jnp.float32).at[:cout, 0].set(be.astype(jnp.float32))

    conv_raw, pool_pad, s_sum, s_sq = pl.pallas_call(
        conv_pool_stats_kernel,
        out_shape=(jax.ShapeDtypeStruct((copad, m_pad), jnp.float32),
                   jax.ShapeDtypeStruct((cpad, m_pad), jnp.float32),
                   jax.ShapeDtypeStruct((copad, 1), jnp.float32),
                   jax.ShapeDtypeStruct((copad, 1), jnp.float32)),
        grid_spec=pltpu.PrefetchScalarGridSpec(
            num_scalar_prefetch=0, grid=(num_tiles,),
            in_specs=[pl.BlockSpec((9 * cpad, tm), lambda i: (0, i)),
                      pl.BlockSpec((copad, 9 * cpad), lambda i: (0, 0))],
            out_specs=(pl.BlockSpec((copad, tm), lambda i: (0, i)),
                       pl.BlockSpec((cpad, tm), lambda i: (0, i)),
                       pl.BlockSpec((copad, 1), lambda i: (0, 0)),
                       pl.BlockSpec((copad, 1), lambda i: (0, 0)))),
        compiler_params=pltpu.CompilerParams(
            dimension_semantics=("arbitrary",),          # stats accumulator axis
            vmem_limit_bytes=32 * 1024 * 1024),
    )(patches, wmat)

    y1_pad = pl.pallas_call(
        functools.partial(bn_relu_kernel, inv_m=1.0 / m, eps=1e-5),
        out_shape=jax.ShapeDtypeStruct((copad, m_pad), jnp.float32),
        grid_spec=pltpu.PrefetchScalarGridSpec(
            num_scalar_prefetch=0, grid=(num_tiles,),
            in_specs=[pl.BlockSpec((copad, tm), lambda i: (0, i)),
                      pl.BlockSpec((copad, 1), lambda i: (0, 0)),
                      pl.BlockSpec((copad, 1), lambda i: (0, 0)),
                      pl.BlockSpec((copad, 1), lambda i: (0, 0)),
                      pl.BlockSpec((copad, 1), lambda i: (0, 0))],
            out_specs=pl.BlockSpec((copad, tm), lambda i: (0, i))),
        compiler_params=pltpu.CompilerParams(
            dimension_semantics=("parallel",),           # independent tiles
            vmem_limit_bytes=32 * 1024 * 1024),
    )(conv_raw, s_sum, s_sq, gamma, beta)

    # strip channel / lane padding, back to NCHW, concat [conv branch, pool branch]
    y1 = jnp.transpose(y1_pad[:cout, :m].reshape(cout, n, ho, wo), (1, 0, 2, 3))
    y2 = jnp.transpose(pool_pad[:cin, :m].reshape(cin, n, ho, wo), (1, 0, 2, 3))
    return jnp.concatenate([y1, y2], axis=1)


def reference_forward(x_nchw, params):
    # Pure-JAX reference mirroring PyTorch Downsample.forward (training-mode BN).
    w, b, g, be = params["w"], params["b"], params["g"], params["be"]
    x = jnp.transpose(x_nchw, (0, 2, 3, 1)).astype(jnp.float32)      # NHWC
    w_hwio = jnp.transpose(w, (2, 3, 1, 0))                          # OIHW -> HWIO
    y = jax.lax.conv_general_dilated(
        x, w_hwio, window_strides=(2, 2), padding="VALID",
        dimension_numbers=("NHWC", "HWIO", "NHWC"))
    y = y + b.reshape(1, 1, 1, -1)
    mean = jnp.mean(y, axis=(0, 1, 2), keepdims=True)
    var = jnp.mean((y - mean) ** 2, axis=(0, 1, 2), keepdims=True)   # biased var
    y = (y - mean) * jax.lax.rsqrt(var + 1e-5)
    y1 = jnp.maximum(y * g.reshape(1, 1, 1, -1) + be.reshape(1, 1, 1, -1), 0.0)
    y2 = jax.lax.reduce_window(x, -jnp.inf, jax.lax.max,
                               (1, 3, 3, 1), (1, 2, 2, 1), "VALID")
    return jnp.concatenate([jnp.transpose(y1, (0, 3, 1, 2)),
                            jnp.transpose(y2, (0, 3, 1, 2))], axis=1)


if __name__ == "__main__":
    in_planes, n3x3 = 4, 8
    N, H, W = 2, 16, 16

    key = jax.random.PRNGKey(0)
    ks = jax.random.split(key, 5)
    params = dict(
        w=0.2 * jax.random.normal(ks[0], (n3x3, in_planes, 3, 3), jnp.float32),  # OIHW
        b=0.1 * jax.random.normal(ks[1], (n3x3,), jnp.float32),
        g=1.0 + 0.1 * jax.random.normal(ks[2], (n3x3,), jnp.float32),
        be=0.1 * jax.random.normal(ks[3], (n3x3,), jnp.float32),
    )
    x = jax.random.normal(ks[4], (N, in_planes, H, W), jnp.float32)   # NCHW like PyTorch

    y = jax.block_until_ready(downsample_forward(x, params))
    y_ref = jax.block_until_ready(reference_forward(x, params))

    Ho = (H - 3) // 2 + 1
    Wo = (W - 3) // 2 + 1
    assert y.shape == (N, n3x3 + in_planes, Ho, Wo), y.shape
    err = float(jnp.max(jnp.abs(y - y_ref)))
    assert jnp.allclose(y, y_ref, atol=1e-3, rtol=1e-3), err
    print("KERNEL_OK")
</pallas_src>

<mosaic_0001>
module attributes {stable_mosaic.version = 11 : i64} {
  func.func @conv_pool_stats_kernel(%arg0: i32, %arg1: memref<72x128xf32, #tpu.memory_space<vmem>>, %arg2: memref<8x72xf32, #tpu.memory_space<vmem>>, %arg3: memref<8x128xf32, #tpu.memory_space<vmem>>, %arg4: memref<8x128xf32, #tpu.memory_space<vmem>>, %arg5: memref<8x1xf32, #tpu.memory_space<vmem>>, %arg6: memref<8x1xf32, #tpu.memory_space<vmem>>) attributes {dimension_semantics = [#tpu.dimension_semantics<arbitrary>], iteration_bounds = array<i64: 1>, scalar_prefetch = 0 : i64, scratch_operands = 0 : i64, tpu.core_type = #tpu.core_type<tc>, window_params = [{transform_indices = @transform_0, window_bounds = array<i64: 72, 128>}, {pipeline_mode = #tpu.pipeline_mode<synchronous>, transform_indices = @transform_1, window_bounds = array<i64: 8, 72>}, {transform_indices = @transform_2, window_bounds = array<i64: 8, 128>}, {transform_indices = @transform_3, window_bounds = array<i64: 8, 128>}, {pipeline_mode = #tpu.pipeline_mode<synchronous>, transform_indices = @transform_4, window_bounds = array<i64: 8, 1>}, {pipeline_mode = #tpu.pipeline_mode<synchronous>, transform_indices = @transform_5, window_bounds = array<i64: 8, 1>}]} {
    %c0 = arith.constant 0 : index
    %c0_0 = arith.constant 0 : index
    %0 = vector.load %arg2[%c0, %c0_0] : memref<8x72xf32, #tpu.memory_space<vmem>>, vector<8x72xf32>
    %c0_1 = arith.constant 0 : index
    %c0_2 = arith.constant 0 : index
    %1 = vector.load %arg1[%c0_1, %c0_2] : memref<72x128xf32, #tpu.memory_space<vmem>>, vector<72x128xf32>
    %cst = arith.constant dense<0.000000e+00> : vector<8x128xf32>
    %2 = tpu.matmul %0, %1, %cst {dimension_numbers = #tpu.dot_dimension_numbers<[1], [0], [0], [1], [0, 0, 1, 1], [], []>} : vector<8x72xf32>, vector<72x128xf32>, vector<8x128xf32> -> vector<8x128xf32>
    %c0_3 = arith.constant 0 : index
    %c0_4 = arith.constant 0 : index
    %3 = vector.load %arg3[%c0_3, %c0_4] : memref<8x128xf32, #tpu.memory_space<vmem>>, vector<8x128xf32>
    tpu.vector_store %arg3[%c0_3, %c0_4], %2 {strides = array<i32>} : memref<8x128xf32, #tpu.memory_space<vmem>>, vector<8x128xf32>,
    %c0_i32 = arith.constant 0 : i32
    %4 = arith.cmpi eq, %arg0, %c0_i32 : i32
    %5 = arith.extui %4 : i1 to i32
    %c0_i32_5 = arith.constant 0 : i32
    %6 = arith.cmpi ne, %5, %c0_i32_5 : i32
    scf.if %6 {
      %cst_28 = arith.constant 0.000000e+00 : f32
      %36 = vector.broadcast %cst_28 : f32 to vector<8x1xf32>
      %c0_29 = arith.constant 0 : index
      %c0_30 = arith.constant 0 : index
      %37 = vector.load %arg5[%c0_29, %c0_30] : memref<8x1xf32, #tpu.memory_space<vmem>>, vector<8x1xf32>
      tpu.vector_store %arg5[%c0_29, %c0_30], %36 {strides = array<i32>} : memref<8x1xf32, #tpu.memory_space<vmem>>, vector<8x1xf32>,
      %cst_31 = arith.constant 0.000000e+00 : f32
      %38 = vector.broadcast %cst_31 : f32 to vector<8x1xf32>
      %c0_32 = arith.constant 0 : index
      %c0_33 = arith.constant 0 : index
      %39 = vector.load %arg6[%c0_32, %c0_33] : memref<8x1xf32, #tpu.memory_space<vmem>>, vector<8x1xf32>
      tpu.vector_store %arg6[%c0_32, %c0_33], %38 {strides = array<i32>} : memref<8x1xf32, #tpu.memory_space<vmem>>, vector<8x1xf32>,
    } else {
    }
    %c0_6 = arith.constant 0 : index
    %c0_7 = arith.constant 0 : index
    %7 = vector.load %arg5[%c0_6, %c0_7] : memref<8x1xf32, #tpu.memory_space<vmem>>, vector<8x1xf32>
    %cst_8 = arith.constant dense<0.000000e+00> : vector<8xf32>
    %8 = vector.multi_reduction <add>, %2, %cst_8 [1] : vector<8x128xf32> to vector<8xf32>
    %9 = vector.shape_cast %8 : vector<8xf32> to vector<8x1xf32>
    %10 = arith.addf %7, %9 : vector<8x1xf32>
    %c0_9 = arith.constant 0 : index
    %c0_10 = arith.constant 0 : index
    %11 = vector.load %arg5[%c0_9, %c0_10] : memref<8x1xf32, #tpu.memory_space<vmem>>, vector<8x1xf32>
    tpu.vector_store %arg5[%c0_9, %c0_10], %10 {strides = array<i32>} : memref<8x1xf32, #tpu.memory_space<vmem>>, vector<8x1xf32>,
    %c0_11 = arith.constant 0 : index
    %c0_12 = arith.constant 0 : index
    %12 = vector.load %arg6[%c0_11, %c0_12] : memref<8x1xf32, #tpu.memory_space<vmem>>, vector<8x1xf32>
    %13 = arith.mulf %2, %2 : vector<8x128xf32>
    %cst_13 = arith.constant dense<0.000000e+00> : vector<8xf32>
    %14 = vector.multi_reduction <add>, %13, %cst_13 [1] : vector<8x128xf32> to vector<8xf32>
    %15 = vector.shape_cast %14 : vector<8xf32> to vector<8x1xf32>
    %16 = arith.addf %12, %15 : vector<8x1xf32>
    %c0_14 = arith.constant 0 : index
    %c0_15 = arith.constant 0 : index
    %17 = vector.load %arg6[%c0_14, %c0_15] : memref<8x1xf32, #tpu.memory_space<vmem>>, vector<8x1xf32>
    tpu.vector_store %arg6[%c0_14, %c0_15], %16 {strides = array<i32>} : memref<8x1xf32, #tpu.memory_space<vmem>>, vector<8x1xf32>,
    %c0_16 = arith.constant 0 : index
    %c0_17 = arith.constant 0 : index
    %18 = vector.load %arg1[%c0_16, %c0_17] : memref<72x128xf32, #tpu.memory_space<vmem>>, vector<8x128xf32>
    %c8 = arith.constant 8 : index
    %c0_18 = arith.constant 0 : index
    %19 = vector.load %arg1[%c8, %c0_18] : memref<72x128xf32, #tpu.memory_space<vmem>>, vector<8x128xf32>
    %20 = arith.maximumf %18, %19 : vector<8x128xf32>
    %c16 = arith.constant 16 : index
    %c0_19 = arith.constant 0 : index
    %21 = vector.load %arg1[%c16, %c0_19] : memref<72x128xf32, #tpu.memory_space<vmem>>, vector<8x128xf32>
    %22 = arith.maximumf %20, %21 : vector<8x128xf32>
    %c24 = arith.constant 24 : index
    %c0_20 = arith.constant 0 : index
    %23 = vector.load %arg1[%c24, %c0_20] : memref<72x128xf32, #tpu.memory_space<vmem>>, vector<8x128xf32>
    %24 = arith.maximumf %22, %23 : vector<8x128xf32>
    %c32 = arith.constant 32 : index
    %c0_21 = arith.constant 0 : index
    %25 = vector.load %arg1[%c32, %c0_21] : memref<72x128xf32, #tpu.memory_space<vmem>>, vector<8x128xf32>
    %26 = arith.maximumf %24, %25 : vector<8x128xf32>
    %c40 = arith.constant 40 : index
    %c0_22 = arith.constant 0 : index
    %27 = vector.load %arg1[%c40, %c0_22] : memref<72x128xf32, #tpu.memory_space<vmem>>, vector<8x128xf32>
    %28 = arith.maximumf %26, %27 : vector<8x128xf32>
    %c48 = arith.constant 48 : index
    %c0_23 = arith.constant 0 : index
    %29 = vector.load %arg1[%c48, %c0_23] : memref<72x128xf32, #tpu.memory_space<vmem>>, vector<8x128xf32>
    %30 = arith.maximumf %28, %29 : vector<8x128xf32>
    %c56 = arith.constant 56 : index
    %c0_24 = arith.constant 0 : index
    %31 = vector.load %arg1[%c56, %c0_24] : memref<72x128xf32, #tpu.memory_space<vmem>>, vector<8x128xf32>
    %32 = arith.maximumf %30, %31 : vector<8x128xf32>
    %c64 = arith.constant 64 : index
    %c0_25 = arith.constant 0 : index
    %33 = vector.load %arg1[%c64, %c0_25] : memref<72x128xf32, #tpu.memory_space<vmem>>, vector<8x128xf32>
    %34 = arith.maximumf %32, %33 : vector<8x128xf32>
    %c0_26 = arith.constant 0 : index
    %c0_27 = arith.constant 0 : index
    %35 = vector.load %arg4[%c0_26, %c0_27] : memref<8x128xf32, #tpu.memory_space<vmem>>, vector<8x128xf32>
    tpu.vector_store %arg4[%c0_26, %c0_27], %34 {strides = array<i32>} : memref<8x128xf32, #tpu.memory_space<vmem>>, vector<8x128xf32>,
    return
  }
  func.func @transform_0(%arg0: i32) -> (i32, i32) {
    %c0_i32 = arith.constant 0 : i32
    %c0_i32_0 = arith.constant 0 : i32
    return %c0_i32, %arg0 : i32, i32
  }
  func.func @transform_1(%arg0: i32) -> (i32, i32) {
    %c0_i32 = arith.constant 0 : i32
    %c0_i32_0 = arith.constant 0 : i32
    %c0_i32_1 = arith.constant 0 : i32
    return %c0_i32, %c0_i32_0 : i32, i32
  }
  func.func @transform_2(%arg0: i32) -> (i32, i32) {
    %c0_i32 = arith.constant 0 : i32
    %c0_i32_0 = arith.constant 0 : i32
    return %c0_i32, %arg0 : i32, i32
  }
  func.func @transform_3(%arg0: i32) -> (i32, i32) {
    %c0_i32 = arith.constant 0 : i32
    %c0_i32_0 = arith.constant 0 : i32
    return %c0_i32, %arg0 : i32, i32
  }
  func.func @transform_4(%arg0: i32) -> (i32, i32) {
    %c0_i32 = arith.constant 0 : i32
    %c0_i32_0 = arith.constant 0 : i32
    %c0_i32_1 = arith.constant 0 : i32
    return %c0_i32, %c0_i32_0 : i32, i32
  }
  func.func @transform_5(%arg0: i32) -> (i32, i32) {
    %c0_i32 = arith.constant 0 : i32
    %c0_i32_0 = arith.constant 0 : i32
    %c0_i32_1 = arith.constant 0 : i32
    return %c0_i32, %c0_i32_0 : i32, i32
  }
}

</mosaic_0001>

<llo_original>
// kernel: tpu_custom_call.1
$region0: #{tpu_custom_call.1}
  #allocation0 [shape = 'u32[]', space=smem, size = 0x4, offset = 0x4, fixed_abs, tag = 'smem constant byte address 0x4 - core index']
  #allocation1 [shape = 'u32[144,128]{1,0:T(1,128)}', space=vmem, size = 0x12000, scoped, tag = 'internal scratch']
  %s0 = inlined_call_operand.hbm [shape: f32[72,128], index: 0, kind: input, shape index: {}]
  %s1 = inlined_call_operand.hbm [shape: f32[8,72], index: 1, kind: input, shape index: {}]
  %s2 = inlined_call_operand.hbm [shape: f32[8,128], index: 2, kind: output, shape index: {0}]
  %s3 = inlined_call_operand.hbm [shape: f32[8,128], index: 3, kind: output, shape index: {1}]
  %s4 = inlined_call_operand.vmem [shape: f32[8,1], index: 4, kind: output, shape index: {2}]
  %s5 = inlined_call_operand.vmem [shape: f32[8,1], index: 5, kind: output, shape index: {3}]
  %6 = xla_tuple %s2, %s3, %s4, %s5
  %s7 = sld [smem:[#allocation0]]
  $region54: #{tpu_custom_call.1} parent=0
    _
  %s9 = ssub.s32 1, %s7
  %s10 = scalar_select 0, %s9, %s7
  $region1: #{tpu_custom_call.1} parent=0
    #allocation2 [shape = 'u8[36864]{0}', space=vmem, size = 0x9000, scoped, tag = 'input window, operand 0, single buffered']
    #allocation3 [shape = 's32[1]{0}', space=sflag, size = 0x4, scoped, tag = 'scoped memory for tpu_custom_call.1']
    #allocation4 [shape = 's32[1]{0}', space=sflag, size = 0x4, scoped, tag = 'scoped memory for tpu_custom_call.1']
    #allocation5 [shape = 'u8[4096]{0}', space=vmem, size = 0x1000, scoped, tag = 'input window, operand 1, single buffered']
    #allocation6 [shape = 's32[1]{0}', space=sflag, size = 0x4, scoped, tag = 'scoped memory for tpu_custom_call.1']
    #allocation7 [shape = 'u8[4096]{0}', space=vmem, size = 0x1000, scoped, tag = 'output window, operand 0, single buffered']
    #allocation8 [shape = 'u8[4096]{0}', space=vmem, size = 0x1000, scoped, tag = 'output window, operand 1, single buffered']
    #allocation9 [shape = 's32[1]{0}', space=sflag, size = 0x4, scoped, tag = 'scoped memory for tpu_custom_call.1']
    %11 = vsyncpa [#allocation3], 0
    %12 = vsyncpa [#allocation6], 0
    %13 = vsyncpa [#allocation4], 0
    %14 = vsyncpa [#allocation9], 0
    // Predicated region
    $region2: #{tpu_custom_call.1} parent=1 // pred_check
      _
    $region3: #{tpu_custom_call.1} parent=1 // pred_check_branch
      %16 = sbr.rel (0) target = $region5
    $region4: #{tpu_custom_call.1} parent=1 // pred_region
      %s18 = ssub.s32 1152, 1152
      %19 = vsyncadd [#allocation3], %s18
      %s20 = sshll.u32 [#allocation2], 4
      %s21 = int_to_ptr.vmem [resolvable:$true] %s20
      %26 = dma.hbm_to_vmem [thread:$0]  %s0, 1152, %s21, [#allocation3], 128, 128, 8
    $region5: #{tpu_custom_call.1} parent=1 // pred_fallthru
      _
    // Predicated region
    $region6: #{tpu_custom_call.1} parent=1 // pred_check
      _
    $region7: #{tpu_custom_call.1} parent=1 // pred_check_branch
      %28 = sbr.rel (0) target = $region9
    $region8: #{tpu_custom_call.1} parent=1 // pred_region
      %s30 = ssub.s32 128, 128
      %31 = vsyncadd [#allocation6], %s30
      %s33 = sshll.u32 [#allocation5], 4
      %s34 = int_to_ptr.vmem [resolvable:$true] %s33
      %36 = dma.hbm_to_vmem [thread:$0]  %s1, 128, %s34, [#allocation6]
    $region9: #{tpu_custom_call.1} parent=1 // pred_fallthru
      _
    // Predicated region
    $region10: #{tpu_custom_call.1} parent=1 // pred_check
      _
    $region11: #{tpu_custom_call.1} parent=1 // pred_check_branch
      %38 = sbr.rel (0) target = $region13
    $region12: #{tpu_custom_call.1} parent=1 // pred_region
      %39 = dma.done [#allocation3], 1152
    $region13: #{tpu_custom_call.1} parent=1 // pred_fallthru
      _
    // Predicated region
    $region14: #{tpu_custom_call.1} parent=1 // pred_check
      _
    $region15: #{tpu_custom_call.1} parent=1 // pred_check_branch
      %41 = sbr.rel (0) target = $region17
    $region16: #{tpu_custom_call.1} parent=1 // pred_region
      %42 = dma.done [#allocation6], 128
    $region17: #{tpu_custom_call.1} parent=1 // pred_fallthru
      _
    %v43 = vld [vmem:[#allocation5] sm:$0xff]
    %v44 = vld [vmem:[#allocation2] sm:$0xff]
    %v45 = vld [vmem:[#allocation2 + $0x8] sm:$0xff]
    %v46 = vld [vmem:[#allocation2 + $0x10] sm:$0xff]
    %v47 = vld [vmem:[#allocation2 + $0x18] sm:$0xff]
    %v48 = vld [vmem:[#allocation2 + $0x20] sm:$0xff]
    %v49 = vld [vmem:[#allocation2 + $0x28] sm:$0xff]
    %v50 = vld [vmem:[#allocation2 + $0x30] sm:$0xff]
    %v51 = vld [vmem:[#allocation2 + $0x38] sm:$0xff]
    %v52 = vld [vmem:[#allocation2 + $0x40] sm:$0xff]
    %vm53 = vcmask 588800
    %v55 = vsel %vm53, %v43, 0
    %57 = vmatprep.subr.mxu0 0.0
    %58 = vmatpush1.msra.mxu0 %v44
    %59 = vmatprep.subr.mxu0 0.0
    %60 = vmatpush1.msra.mxu0 %v45
    %61 = vmatprep.subr.mxu0 0.0
    %62 = vmatpush1.msra.mxu0 %v46
    %63 = vmatprep.subr.mxu0 0.0
    %64 = vmatpush1.msra.mxu0 %v47
    %65 = vmatprep.subr.mxu0 0.0
    %66 = vmatpush1.msra.mxu0 %v48
    %67 = vmatprep.subr.mxu0 0.0
    %68 = vmatpush1.msra.mxu0 %v49
    %69 = vmatprep.subr.mxu0 0.0
    %70 = vmatpush1.msra.mxu0 %v50
    %71 = vmatprep.subr.mxu0 0.0
    %72 = vmatpush1.msra.mxu0 %v51
    %73 = vmatprep.subr.mxu0 0.0
    %74 = vmatpush1.msra.mxu0 %v52
    %75 = vmatprep.subr.mxu0 0.0
    %76 = vmatpush1.msra.mxu0 0.0
    %77 = vmatprep.subr.mxu0 0.0
    %78 = vmatpush1.msra.mxu0 0.0
    %79 = vmatprep.subr.mxu0 0.0
    %80 = vmatpush1.msra.mxu0 0.0
    %81 = vmatprep.subr.mxu0 0.0
    %82 = vmatpush1.msra.mxu0 0.0
    %83 = vmatprep.subr.mxu0 0.0
    %84 = vmatpush1.msra.mxu0 0.0
    %85 = vmatprep.subr.mxu0 0.0
    %86 = vmatpush1.msra.mxu0 0.0
    %87 = vmatprep.subr.mxu0 0.0
    %88 = vmatpush1.msra.mxu0 0.0
    %89 = vmatprep.subr.mxu0 0.0
    %90 = vmatpush1.msra.mxu0 0.0
    %91 = vmatprep.subr.mxu0 0.0
    %92 = vmatpush1.msra.mxu0 0.0
    %93 = vmatprep.subr.mxu0 0.0
    %94 = vmatpush1.msra.mxu0 0.0
    %95 = vmatprep.subr.mxu0 0.0
    %96 = vmatpush1.msra.mxu0 0.0
    %97 = vmatprep.subr.mxu0 0.0
    %98 = vmatpush1.msra.mxu0 0.0
    %99 = vmatprep.subr.mxu0 0.0
    %100 = vmatpush1.msra.mxu0 0.0
    %101 = vmatprep.subr.mxu0 0.0
    %102 = vmatpush1.msra.mxu0 0.0
    %103 = vmatprep.subr.mxu0 0.0
    %104 = vmatpush1.msra.mxu0 0.0
    %105 = vmatprep.subr.mxu0 0.0
    %106 = vmatpush1.msra.mxu0 0.0
    %107 = vmatprep.subr.mxu0 0.0
    %108 = vmatpush1.msra.mxu0 0.0
    %109 = vmatprep.subr.mxu0 0.0
    %110 = vmatpush1.msra.mxu0 0.0
    %111 = vmatprep.subr.mxu0 0.0
    %112 = vmatpush1.msra.mxu0 0.0
    %113 = vmatprep.subr.mxu0 0.0
    %114 = vmatpush1.msra.mxu0 0.0
    %115 = vmatprep.subr.mxu0 0.0
    %116 = vmatpush1.msra.mxu0 0.0
    %117 = vmatprep.subr.mxu0 0.0
    %118 = vmatpush1.msra.mxu0 0.0
    %119 = vmatprep.subr.mxu0 0.0
    %120 = vmatpush1.msra.mxu0 0.0
    %121 = vmatprep.mubr.f32.mxu0 0.0
    %122 = vmatmul.mubr.f32.gmra.mrb[0].mxu0 %v55
    %v123 = vpop.f32.mrb[0].mxu0
    %v124 = vadd.f32 0.0, %v123
    %v125 = vpop.f32.mrb[0].mxu0
    %126 = vdwg.mxu0
    %127 = vst [vmem:[#allocation7] sm:$0xff] %v124
    %p128 = scmp.eq.s32.totalorder 0, 0
    // Predicated region
    $region18: #{tpu_custom_call.1} parent=1 // pred_check
      %p129 = pneg %p128
    $region19: #{tpu_custom_call.1} parent=1 // pred_check_branch
      %131 = sbr.rel (%p129) target = $region21
    $region20: #{tpu_custom_call.1} parent=1 // pred_region
      %vm132 = vcmask 7168
      %133 = vst.msk [vmem:[%s4] sm:$0xff] %vm132, 0.0
      %134 = vst.msk [vmem:[%s5] sm:$0xff] %vm132, 0.0
    $region21: #{tpu_custom_call.1} parent=1 // pred_fallthru
      _
    %v135 = vld [vmem:[%s4] sm:$0xff]
    %136 = vadd.xlane.f32.xlu0 %v124
    %v137 = vpop.xlane.xlu0 %136
    %v138 = vadd.f32 %v135, %v137
    %vm139 = vcmask 7168
    %140 = vst.msk [vmem:[%s4] sm:$0xff] %vm139, %v138
    %v141 = vld [vmem:[%s5] sm:$0xff]
    %v142 = vmul.f32 %v124, %v124
    %143 = vadd.xlane.f32.xlu0 %v142
    %v144 = vpop.xlane.xlu0 %143
    %v145 = vadd.f32 %v141, %v144
    %146 = vst.msk [vmem:[%s5] sm:$0xff] %vm139, %v145
    %v147 = vld [vmem:[#allocation2] sm:$0xff]
    %v148 = vld [vmem:[#allocation2 + $0x8] sm:$0xff]
    %v149 = vmax.f32 %v147, %v148
    %v150 = vld [vmem:[#allocation2 + $0x10] sm:$0xff]
    %v151 = vmax.f32 %v149, %v150
    %v152 = vld [vmem:[#allocation2 + $0x18] sm:$0xff]
    %v153 = vmax.f32 %v151, %v152
    %v154 = vld [vmem:[#allocation2 + $0x20] sm:$0xff]
    %v155 = vmax.f32 %v153, %v154
    %v156 = vld [vmem:[#allocation2 + $0x28] sm:$0xff]
    %v157 = vmax.f32 %v155, %v156
    %v158 = vld [vmem:[#allocation2 + $0x30] sm:$0xff]
    %v159 = vmax.f32 %v157, %v158
    %v160 = vld [vmem:[#allocation2 + $0x38] sm:$0xff]
    %v161 = vmax.f32 %v159, %v160
    %v162 = vld [vmem:[#allocation2 + $0x40] sm:$0xff]
    %v163 = vmax.f32 %v161, %v162
    %164 = vst [vmem:[#allocation8] sm:$0xff] %v163
    // Predicated region
    $region22: #{tpu_custom_call.1} parent=1 // pred_check
      _
    $region23: #{tpu_custom_call.1} parent=1 // pred_check_branch
      %166 = sbr.rel (0) target = $region25
    $region24: #{tpu_custom_call.1} parent=1 // pred_region
      %s168 = ssub.s32 128, 128
      %169 = vsyncadd [#allocation4], %s168
      %s171 = sshll.u32 [#allocation7], 4
      %s172 = int_to_ptr.vmem [resolvable:$true] %s171
      %174 = dma.vmem_to_hbm [thread:$0]  %s172, 128, %s2, [#allocation4]
    $region25: #{tpu_custom_call.1} parent=1 // pred_fallthru
      _
    // Predicated region
    $region26: #{tpu_custom_call.1} parent=1 // pred_check
      _
    $region27: #{tpu_custom_call.1} parent=1 // pred_check_branch
      %176 = sbr.rel (0) target = $region29
    $region28: #{tpu_custom_call.1} parent=1 // pred_region
      %s178 = ssub.s32 128, 128
      %179 = vsyncadd [#allocation9], %s178
      %s181 = sshll.u32 [#allocation8], 4
      %s182 = int_to_ptr.vmem [resolvable:$true] %s181
      %184 = dma.vmem_to_hbm [thread:$0]  %s182, 128, %s3, [#allocation9]
    $region29: #{tpu_custom_call.1} parent=1 // pred_fallthru
      _
    // Predicated region
    $region30: #{tpu_custom_call.1} parent=1 // pred_check
      _
    $region31: #{tpu_custom_call.1} parent=1 // pred_check_branch
      %186 = sbr.rel (0) target = $region33
    $region32: #{tpu_custom_call.1} parent=1 // pred_region
      _
    $region33: #{tpu_custom_call.1} parent=1 // pred_fallthru
      _
    // Predicated region
    $region34: #{tpu_custom_call.1} parent=1 // pred_check
      _
    $region35: #{tpu_custom_call.1} parent=1 // pred_check_branch
      %188 = sbr.rel (0) target = $region37
    $region36: #{tpu_custom_call.1} parent=1 // pred_region
      _
    $region37: #{tpu_custom_call.1} parent=1 // pred_fallthru
      _
    // Predicated region
    $region38: #{tpu_custom_call.1} parent=1 // pred_check
      _
    $region39: #{tpu_custom_call.1} parent=1 // pred_check_branch
      %190 = sbr.rel (0) target = $region41
    $region40: #{tpu_custom_call.1} parent=1 // pred_region
      %191 = dma.done [#allocation4], 128
    $region41: #{tpu_custom_call.1} parent=1 // pred_fallthru
      _
    // Predicated region
    $region42: #{tpu_custom_call.1} parent=1 // pred_check
      _
    $region43: #{tpu_custom_call.1} parent=1 // pred_check_branch
      %193 = sbr.rel (0) target = $region45
    $region44: #{tpu_custom_call.1} parent=1 // pred_region
      %194 = dma.done [#allocation9], 128
    $region45: #{tpu_custom_call.1} parent=1 // pred_fallthru
      _
    // Predicated region
    $region46: #{tpu_custom_call.1} parent=1 // pred_check
      _
    $region47: #{tpu_custom_call.1} parent=1 // pred_check_branch
      %196 = sbr.rel (0) target = $region49
    $region48: #{tpu_custom_call.1} parent=1 // pred_region
      _
    $region49: #{tpu_custom_call.1} parent=1 // pred_fallthru
      _
    // Predicated region
    $region50: #{tpu_custom_call.1} parent=1 // pred_check
      _
    $region51: #{tpu_custom_call.1} parent=1 // pred_check_branch
      %198 = sbr.rel (0) target = $region53
    $region52: #{tpu_custom_call.1} parent=1 // pred_region
      _
    $region53: #{tpu_custom_call.1} parent=1 // pred_fallthru
      _
    %199 = vsyncpa [#allocation3], 1
    %200 = vsyncpa [#allocation6], 1
    %201 = vsyncpa [#allocation4], 1
    %202 = vsyncpa [#allocation9], 1

</llo_original>
